<compile_context>
chip_gen: v7x
topology: tpu7x:2x2x1
jax: 0.10.0
libtpu: 0.0.40
codegen_flags: <defaults>
</compile_context>

<pallas_src>
import functools

import jax
import jax.numpy as jnp
from jax.experimental import pallas as pl
from jax.experimental.pallas import tpu as pltpu

_MIB = 1024 * 1024


def _round_up(a: int, b: int) -> int:
    return ((a + b - 1) // b) * b


def _sublane_min(dtype) -> int:
    # minimum sublane extent per dtype packing: f32 -> 8, bf16 -> 16, int8/fp8 -> 32
    return {4: 8, 2: 16, 1: 32}[jnp.dtype(dtype).itemsize]


def _vmem_limit_bytes() -> int:
    cap = 64 * _MIB  # safe fallback = v7x per-TC VMEM
    try:
        cap = int(getattr(pltpu.get_tpu_info(), "vmem_capacity_bytes", cap))
    except Exception:
        pass
    # stay well below physical capacity: ~54 MiB on v7x, 100 MiB on v5e/v6e
    return min(int(cap * 0.85), 100 * _MIB)


# ---------------------------------------------------------------------------
# Kernel 1: per-row inverse L2 norm of the weight (one reduction pass).
# ---------------------------------------------------------------------------
def _inv_norm_kernel(w_ref, o_ref, acc_ref):
    @pl.when(pl.program_id(1) == 0)
    def _():
        acc_ref[...] = jnp.zeros_like(acc_ref)

    w = w_ref[...].astype(jnp.float32)        # norm math in f32 (v5e has no bf16 VPU)
    acc_ref[...] += jnp.sum(w * w, axis=-1, keepdims=True)

    @pl.when(pl.program_id(1) == pl.num_programs(1) - 1)
    def _():
        # F.normalize: denom = max(||v||, 1e-12)  ->  inv = rsqrt(max(sumsq, 1e-24))
        o_ref[...] = jax.lax.rsqrt(jnp.maximum(acc_ref[...], 1e-24))


def _row_inv_norms(w):
    """f32 vector of per-row 1/max(||row||_2, 1e-12) for a 2-D weight."""
    R, C = w.shape
    sub = _sublane_min(w.dtype)
    it = jnp.dtype(w.dtype).itemsize
    budget = 8 * _MIB  # this pass is HBM-bound; a modest footprint pipelines fine

    if 2 * sub * C * it <= budget:
        tc = C                                                # full last dim, no pad
    else:
        tc = max(128, (budget // (2 * sub * it)) // 128 * 128)
    tr = max(sub, (budget // (2 * tc * it)) // sub * sub)
    tr = min(tr, 2048, _round_up(R, sub))

    Rp, Cp = _round_up(R, tr), _round_up(C, tc)
    wp = w if (Rp, Cp) == (R, C) else jnp.pad(w, ((0, Rp - R), (0, Cp - C)))

    out = pl.pallas_call(
        _inv_norm_kernel,
        out_shape=jax.ShapeDtypeStruct((Rp, 1), jnp.float32),
        grid_spec=pltpu.PrefetchScalarGridSpec(
            num_scalar_prefetch=0,
            grid=(Rp // tr, Cp // tc),
            in_specs=[pl.BlockSpec((tr, tc), lambda i, j: (i, j))],
            out_specs=pl.BlockSpec((tr, 1), lambda i, j: (i, 0)),
            scratch_shapes=[pltpu.VMEM((tr, 1), jnp.float32)],
        ),
        compiler_params=pltpu.CompilerParams(
            dimension_semantics=("parallel", "arbitrary"),
            vmem_limit_bytes=_vmem_limit_bytes(),
        ),
    )(wp)
    return out[:R, 0]


# ---------------------------------------------------------------------------
# Kernel 2: tiled matmul with f32 accumulator (+ optional folded normalization)
# ---------------------------------------------------------------------------
def _mm_kernel(*refs, transpose: bool, normalize: bool, k_steps: int):
    if normalize:
        x_ref, w_ref, s_ref = refs[0], refs[1], refs[2]
        rest = refs[3:]
    else:
        x_ref, w_ref = refs[0], refs[1]
        s_ref = None
        rest = refs[2:]
    if k_steps == 1:
        (o_ref,) = rest
        acc_ref = None
    else:
        o_ref, acc_ref = rest

    x = x_ref[...]
    if normalize and not transpose:
        # fold row norms of the (K, N) weight into x along K:
        #   x @ (diag(s) @ W) == (x * s) @ W      (s block: (1, tk), x's dtype)
        x = x * s_ref[...]

    if transpose:
        # w block is (tn, tk); contract K (axis 1) of both operands on the MXU —
        # no in-kernel transpose.
        partial = jax.lax.dot_general(
            x, w_ref[...],
            dimension_numbers=(((1,), (1,)), ((), ())),
            preferred_element_type=jnp.float32)
    else:
        partial = jnp.dot(x, w_ref[...], preferred_element_type=jnp.float32)

    def _finalize(acc):
        if normalize and transpose:
            # x @ (diag(s) @ W).T == (x @ W.T) * s   (s block: (1, tn), f32)
            acc = acc * s_ref[...]
        o_ref[...] = acc.astype(o_ref.dtype)

    if k_steps == 1:
        _finalize(partial)                    # single K step: no scratch, no RMW
    else:
        k = pl.program_id(2)

        @pl.when(k == 0)
        def _():
            acc_ref[...] = partial            # write directly (no zero-init + RMW)

        @pl.when(k > 0)
        def _():
            acc_ref[...] += partial

        @pl.when(k == k_steps - 1)
        def _():
            _finalize(acc_ref[...])


def matrix_multiply(x, tensor, *, transpose=False, normalize=False,
                    tm=512, tn=1024, tk=1024):
    """Pallas equivalent of MatrixMultiply.forward (supports batched x)."""
    orig_batch = x.shape[:-1]
    x2 = x.reshape(-1, x.shape[-1]) if x.ndim != 2 else x
    M, K = x2.shape
    if transpose:
        N, K2 = tensor.shape
    else:
        K2, N = tensor.shape
    assert K == K2, "contracting dimension mismatch"

    out_dtype = x2.dtype
    sub_m = _sublane_min(x2.dtype)

    # ---- tile selection --------------------------------------------------
    # Clamp requested tiles to the (dtype-aligned) problem size. Defaults are
    # 256-aligned for the v6e/v7x 2x256x256 MXU; lane dims stay multiples of 128.
    tm = min(tm, _round_up(M, sub_m))
    tn = min(tn, _round_up(N, 128))
    tk = min(tk, _round_up(K, 128))

    # v7x has 2 TensorCores: if the whole (M, N) output is a single block, split
    # N so both cores get work under ("parallel","parallel","arbitrary").
    if M <= tm and N <= tn and tn >= 512:
        tn = _round_up(tn // 2, 256)

    # Shrink tiles until the double-buffered footprint fits the VMEM budget.
    x_it = jnp.dtype(x2.dtype).itemsize
    w_it = jnp.dtype(tensor.dtype).itemsize
    o_it = jnp.dtype(out_dtype).itemsize
    vmem_limit = _vmem_limit_bytes()
    budget = vmem_limit - 8 * _MIB            # headroom for compiler scratch

    def _footprint(tm_, tn_, tk_):
        fp = 2 * tm_ * tk_ * x_it             # x blocks (double buffered)
        fp += 2 * tk_ * tn_ * w_it            # w blocks (double buffered)
        fp += 2 * tm_ * tn_ * o_it            # out blocks (double buffered)
        fp += tm_ * tn_ * 4                   # f32 accumulator scratch
        fp += 4 * 4 * max(tk_, tn_)           # scale stream (tiny)
        return fp

    while _footprint(tm, tn, tk) > budget:
        if tk > 512:
            tk = _round_up(tk // 2, 128)
        elif tn > 256:
            tn = _round_up(tn // 2, 128)
        elif tm > max(sub_m, 64):
            tm = max(sub_m, _round_up(tm // 2, sub_m))
        elif tk > 128:
            tk = _round_up(tk // 2, 128)
        elif tn > 128:
            tn = _round_up(tn // 2, 128)
        elif tm > sub_m:
            tm = max(sub_m, _round_up(tm // 2, sub_m))
        else:
            break

    Mp, Np, Kp = _round_up(M, tm), _round_up(N, tn), _round_up(K, tk)
    k_steps = Kp // tk

    # ---- operands / specs --------------------------------------------------
    xp = x2 if (Mp, Kp) == (M, K) else jnp.pad(x2, ((0, Mp - M), (0, Kp - K)))
    in_specs = [pl.BlockSpec((tm, tk), lambda i, j, k: (i, k))]
    operands = [xp]

    if transpose:
        wp = tensor if (Np, Kp) == (N, K) else jnp.pad(
            tensor, ((0, Np - N), (0, Kp - K)))
        in_specs.append(pl.BlockSpec((tn, tk), lambda i, j, k: (j, k)))
    else:
        wp = tensor if (Kp, Np) == (K, N) else jnp.pad(
            tensor, ((0, Kp - K), (0, Np - N)))
        in_specs.append(pl.BlockSpec((tk, tn), lambda i, j, k: (k, j)))
    operands.append(wp)

    if normalize:
        # One reduction pass over the weight -> per-row 1/max(||row||, 1e-12);
        # no normalized copy of the weight is ever written back to HBM.
        inv = _row_inv_norms(tensor)                  # f32, length K or N
        if transpose:
            s = jnp.pad(inv.reshape(1, N), ((0, 0), (0, Np - N)))
            in_specs.append(pl.BlockSpec((1, tn), lambda i, j, k: (0, j)))
        else:
            s = jnp.pad(inv.astype(x2.dtype).reshape(1, K),
                        ((0, 0), (0, Kp - K)))
            in_specs.append(pl.BlockSpec((1, tk), lambda i, j, k: (0, k)))
        operands.append(s)

    scratch = [] if k_steps == 1 else [pltpu.VMEM((tm, tn), jnp.float32)]
    kernel = functools.partial(_mm_kernel, transpose=transpose,
                               normalize=normalize, k_steps=k_steps)

    n_i, n_j = Mp // tm, Np // tn
    bytes_accessed = (n_j * Mp * Kp * x_it            # x re-read once per N tile
                      + n_i * Kp * Np * w_it          # w re-read once per M tile
                      + Mp * Np * o_it)

    out = pl.pallas_call(
        kernel,
        out_shape=jax.ShapeDtypeStruct((Mp, Np), out_dtype),
        grid_spec=pltpu.PrefetchScalarGridSpec(
            num_scalar_prefetch=0,
            grid=(n_i, n_j, k_steps),
            in_specs=in_specs,
            out_specs=pl.BlockSpec((tm, tn), lambda i, j, k: (i, j)),
            scratch_shapes=scratch,
        ),
        compiler_params=pltpu.CompilerParams(
            dimension_semantics=("parallel", "parallel", "arbitrary"),
            vmem_limit_bytes=vmem_limit,
        ),
        cost_estimate=pl.CostEstimate(
            flops=2 * M * N * K,
            transcendentals=0,
            bytes_accessed=int(bytes_accessed),
        ),
    )(*operands)

    out = out[:M, :N] if (Mp, Np) != (M, N) else out
    return out.reshape(*orig_batch, N)


# ---------------------------------------------------------------------------
# Reference + self-test
# ---------------------------------------------------------------------------
def _reference(x, tensor, *, transpose=False, normalize=False):
    t = tensor.astype(jnp.float32)
    if normalize:
        n = jnp.sqrt(jnp.sum(t * t, axis=-1, keepdims=True))
        t = t / jnp.maximum(n, 1e-12)
    if transpose:
        t = t.T
    return (x.astype(jnp.float32) @ t).astype(x.dtype)


if __name__ == "__main__":
    key = jax.random.PRNGKey(0)
    k1, k2, k3, k4, k5 = jax.random.split(key, 5)

    # small shapes: batch=2, seq=8, hidden=32, out=16
    M, K, N = 8, 32, 16
    x = jax.random.normal(k1, (M, K), dtype=jnp.float32)
    w_kn = jax.random.normal(k2, (K, N), dtype=jnp.float32)   # transpose=False layout
    w_nk = jax.random.normal(k3, (N, K), dtype=jnp.float32)   # transpose=True layout
    xb = jax.random.normal(k4, (2, M, K), dtype=jnp.float32)  # batched input

    # multi-K-step shapes (exercise the f32 accumulator path via tk=128)
    M2, K2, N2 = 16, 384, 256
    x2 = jax.random.normal(k5, (M2, K2), dtype=jnp.float32)
    w2 = jax.random.normal(k2, (N2, K2), dtype=jnp.float32)   # (N, K) layout

    cases = [
        (x,  w_kn, dict(transpose=False, normalize=False), {}),
        (x,  w_nk, dict(transpose=True,  normalize=True),  {}),
        (x,  w_kn, dict(transpose=False, normalize=True),  {}),
        (xb, w_kn, dict(transpose=False, normalize=True),  {}),
        (x2, w2,   dict(transpose=True,  normalize=True),  dict(tk=128)),
        (x2, w2.T, dict(transpose=False, normalize=False), dict(tk=128)),
    ]

    for xi, wi, flags, tiles in cases:
        out = matrix_multiply(xi, wi, **flags, **tiles)
        jax.block_until_ready(out)
        ref = _reference(xi, wi, **flags)
        assert out.shape == ref.shape, (out.shape, ref.shape, flags)
        assert jnp.allclose(out, ref, atol=2e-4, rtol=2e-4), flags

    print("KERNEL_OK")
</pallas_src>

<mosaic_0001>
module attributes {stable_mosaic.version = 11 : i64} {
  func.func @_mm_kernel(%arg0: i32, %arg1: i32, %arg2: i32, %arg3: memref<8x128xf32, #tpu.memory_space<vmem>>, %arg4: memref<128x128xf32, #tpu.memory_space<vmem>>, %arg5: memref<8x128xf32, #tpu.memory_space<vmem>>) attributes {dimension_semantics = [#tpu.dimension_semantics<parallel>, #tpu.dimension_semantics<parallel>, #tpu.dimension_semantics<arbitrary>], iteration_bounds = array<i64: 1, 1, 1>, scalar_prefetch = 0 : i64, scratch_operands = 0 : i64, tpu.core_type = #tpu.core_type<tc>, window_params = [{transform_indices = @transform_0, window_bounds = array<i64: 8, 128>}, {transform_indices = @transform_1, window_bounds = array<i64: 128, 128>}, {transform_indices = @transform_2, window_bounds = array<i64: 8, 128>}]} {
    %c0 = arith.constant 0 : index
    %c0_0 = arith.constant 0 : index
    %0 = vector.load %arg3[%c0, %c0_0] : memref<8x128xf32, #tpu.memory_space<vmem>>, vector<8x128xf32>
    %c0_1 = arith.constant 0 : index
    %c0_2 = arith.constant 0 : index
    %1 = vector.load %arg4[%c0_1, %c0_2] : memref<128x128xf32, #tpu.memory_space<vmem>>, vector<128x128xf32>
    %cst = arith.constant dense<0.000000e+00> : vector<8x128xf32>
    %2 = tpu.matmul %0, %1, %cst {dimension_numbers = #tpu.dot_dimension_numbers<[1], [0], [0], [1], [0, 0, 1, 1], [], []>} : vector<8x128xf32>, vector<128x128xf32>, vector<8x128xf32> -> vector<8x128xf32>
    %c0_3 = arith.constant 0 : index
    %c0_4 = arith.constant 0 : index
    %3 = vector.load %arg5[%c0_3, %c0_4] : memref<8x128xf32, #tpu.memory_space<vmem>>, vector<8x128xf32>
    tpu.vector_store %arg5[%c0_3, %c0_4], %2 {strides = array<i32>} : memref<8x128xf32, #tpu.memory_space<vmem>>, vector<8x128xf32>,
    return
  }
  func.func @transform_0(%arg0: i32, %arg1: i32, %arg2: i32) -> (i32, i32) {
    %c0_i32 = arith.constant 0 : i32
    return %arg0, %arg2 : i32, i32
  }
  func.func @transform_1(%arg0: i32, %arg1: i32, %arg2: i32) -> (i32, i32) {
    %c0_i32 = arith.constant 0 : i32
    return %arg2, %arg1 : i32, i32
  }
  func.func @transform_2(%arg0: i32, %arg1: i32, %arg2: i32) -> (i32, i32) {
    %c0_i32 = arith.constant 0 : i32
    return %arg0, %arg1 : i32, i32
  }
}

</mosaic_0001>

<llo_original>
// kernel: tpu_custom_call.1
$region0: #{tpu_custom_call.1}
  #allocation0 [shape = 'u32[]', space=smem, size = 0x4, offset = 0x4, fixed_abs, tag = 'smem constant byte address 0x4 - core index']
  #allocation1 [shape = 'u32[144,128]{1,0:T(1,128)}', space=vmem, size = 0x12000, scoped, tag = 'internal scratch']
  %s0 = inlined_call_operand.hbm [shape: f32[8,128], index: 0, kind: input, shape index: {}]
  %s1 = inlined_call_operand.hbm [shape: f32[128,128], index: 1, kind: input, shape index: {}]
  %s2 = inlined_call_operand.hbm [shape: f32[8,128], index: 2, kind: output, shape index: {}]
  %s3 = sld [smem:[#allocation0]]
  $region26: #{tpu_custom_call.1} parent=0
    _
  %s5 = ssub.s32 1, %s3
  %s6 = scalar_select 0, %s5, %s3
  $region1: #{tpu_custom_call.1} parent=0
    #allocation2 [shape = 'u8[4096]{0}', space=vmem, size = 0x1000, scoped, tag = 'input window, operand 0, single buffered']
    #allocation3 [shape = 's32[1]{0}', space=sflag, size = 0x4, scoped, tag = 'scoped memory for tpu_custom_call.1']
    #allocation4 [shape = 's32[1]{0}', space=sflag, size = 0x4, scoped, tag = 'scoped memory for tpu_custom_call.1']
    #allocation5 [shape = 'u8[65536]{0}', space=vmem, size = 0x10000, scoped, tag = 'input window, operand 1, single buffered']
    #allocation6 [shape = 's32[1]{0}', space=sflag, size = 0x4, scoped, tag = 'scoped memory for tpu_custom_call.1']
    #allocation7 [shape = 'u8[4096]{0}', space=vmem, size = 0x1000, scoped, tag = 'output window, operand 0, single buffered']
    %7 = vsyncpa [#allocation3], 0
    %8 = vsyncpa [#allocation6], 0
    %9 = vsyncpa [#allocation4], 0
    // Predicated region
    $region2: #{tpu_custom_call.1} parent=1 // pred_check
      _
    $region3: #{tpu_custom_call.1} parent=1 // pred_check_branch
      %11 = sbr.rel (0) target = $region5
    $region4: #{tpu_custom_call.1} parent=1 // pred_region
      %s13 = ssub.s32 128, 128
      %14 = vsyncadd [#allocation3], %s13
      %s16 = sshll.u32 [#allocation2], 4
      %s17 = int_to_ptr.vmem [resolvable:$true] %s16
      %19 = dma.hbm_to_vmem [thread:$0]  %s0, 128, %s17, [#allocation3]
    $region5: #{tpu_custom_call.1} parent=1 // pred_fallthru
      _
    // Predicated region
    $region6: #{tpu_custom_call.1} parent=1 // pred_check
      _
    $region7: #{tpu_custom_call.1} parent=1 // pred_check_branch
      %21 = sbr.rel (0) target = $region9
    $region8: #{tpu_custom_call.1} parent=1 // pred_region
      %s23 = ssub.s32 2048, 2048
      %24 = vsyncadd [#allocation6], %s23
      %s25 = sshll.u32 [#allocation5], 4
      %s26 = int_to_ptr.vmem [resolvable:$true] %s25
      %31 = dma.hbm_to_vmem [thread:$0]  %s1, 2048, %s26, [#allocation6], 128, 128, 8
    $region9: #{tpu_custom_call.1} parent=1 // pred_fallthru
      _
    // Predicated region
    $region10: #{tpu_custom_call.1} parent=1 // pred_check
      _
    $region11: #{tpu_custom_call.1} parent=1 // pred_check_branch
      %33 = sbr.rel (0) target = $region13
    $region12: #{tpu_custom_call.1} parent=1 // pred_region
      %34 = dma.done [#allocation3], 128
    $region13: #{tpu_custom_call.1} parent=1 // pred_fallthru
      _
    // Predicated region
    $region14: #{tpu_custom_call.1} parent=1 // pred_check
      _
    $region15: #{tpu_custom_call.1} parent=1 // pred_check_branch
      %36 = sbr.rel (0) target = $region17
    $region16: #{tpu_custom_call.1} parent=1 // pred_region
      %37 = dma.done [#allocation6], 2048
    $region17: #{tpu_custom_call.1} parent=1 // pred_fallthru
      _
    %v38 = vld [vmem:[#allocation2] sm:$0xff]
    %v39 = vld [vmem:[#allocation5] sm:$0xff]
    %v40 = vld [vmem:[#allocation5 + $0x8] sm:$0xff]
    %v41 = vld [vmem:[#allocation5 + $0x10] sm:$0xff]
    %v42 = vld [vmem:[#allocation5 + $0x18] sm:$0xff]
    %v43 = vld [vmem:[#allocation5 + $0x20] sm:$0xff]
    %v44 = vld [vmem:[#allocation5 + $0x28] sm:$0xff]
    %v45 = vld [vmem:[#allocation5 + $0x30] sm:$0xff]
    %v46 = vld [vmem:[#allocation5 + $0x38] sm:$0xff]
    %v47 = vld [vmem:[#allocation5 + $0x40] sm:$0xff]
    %v48 = vld [vmem:[#allocation5 + $0x48] sm:$0xff]
    %v49 = vld [vmem:[#allocation5 + $0x50] sm:$0xff]
    %v50 = vld [vmem:[#allocation5 + $0x58] sm:$0xff]
    %v51 = vld [vmem:[#allocation5 + $0x60] sm:$0xff]
    %v52 = vld [vmem:[#allocation5 + $0x68] sm:$0xff]
    %v53 = vld [vmem:[#allocation5 + $0x70] sm:$0xff]
    %v54 = vld [vmem:[#allocation5 + $0x78] sm:$0xff]
    %55 = vmatprep.subr.mxu0 0.0
    %56 = vmatpush1.msra.mxu0 %v39
    %57 = vmatprep.subr.mxu0 0.0
    %58 = vmatpush1.msra.mxu0 %v40
    %59 = vmatprep.subr.mxu0 0.0
    %60 = vmatpush1.msra.mxu0 %v41
    %61 = vmatprep.subr.mxu0 0.0
    %62 = vmatpush1.msra.mxu0 %v42
    %63 = vmatprep.subr.mxu0 0.0
    %64 = vmatpush1.msra.mxu0 %v43
    %65 = vmatprep.subr.mxu0 0.0
    %66 = vmatpush1.msra.mxu0 %v44
    %67 = vmatprep.subr.mxu0 0.0
    %68 = vmatpush1.msra.mxu0 %v45
    %69 = vmatprep.subr.mxu0 0.0
    %70 = vmatpush1.msra.mxu0 %v46
    %71 = vmatprep.subr.mxu0 0.0
    %72 = vmatpush1.msra.mxu0 %v47
    %73 = vmatprep.subr.mxu0 0.0
    %74 = vmatpush1.msra.mxu0 %v48
    %75 = vmatprep.subr.mxu0 0.0
    %76 = vmatpush1.msra.mxu0 %v49
    %77 = vmatprep.subr.mxu0 0.0
    %78 = vmatpush1.msra.mxu0 %v50
    %79 = vmatprep.subr.mxu0 0.0
    %80 = vmatpush1.msra.mxu0 %v51
    %81 = vmatprep.subr.mxu0 0.0
    %82 = vmatpush1.msra.mxu0 %v52
    %83 = vmatprep.subr.mxu0 0.0
    %84 = vmatpush1.msra.mxu0 %v53
    %85 = vmatprep.subr.mxu0 0.0
    %86 = vmatpush1.msra.mxu0 %v54
    %87 = vmatprep.subr.mxu0 0.0
    %88 = vmatpush1.msra.mxu0 0.0
    %89 = vmatprep.subr.mxu0 0.0
    %90 = vmatpush1.msra.mxu0 0.0
    %91 = vmatprep.subr.mxu0 0.0
    %92 = vmatpush1.msra.mxu0 0.0
    %93 = vmatprep.subr.mxu0 0.0
    %94 = vmatpush1.msra.mxu0 0.0
    %95 = vmatprep.subr.mxu0 0.0
    %96 = vmatpush1.msra.mxu0 0.0
    %97 = vmatprep.subr.mxu0 0.0
    %98 = vmatpush1.msra.mxu0 0.0
    %99 = vmatprep.subr.mxu0 0.0
    %100 = vmatpush1.msra.mxu0 0.0
    %101 = vmatprep.subr.mxu0 0.0
    %102 = vmatpush1.msra.mxu0 0.0
    %103 = vmatprep.subr.mxu0 0.0
    %104 = vmatpush1.msra.mxu0 0.0
    %105 = vmatprep.subr.mxu0 0.0
    %106 = vmatpush1.msra.mxu0 0.0
    %107 = vmatprep.subr.mxu0 0.0
    %108 = vmatpush1.msra.mxu0 0.0
    %109 = vmatprep.subr.mxu0 0.0
    %110 = vmatpush1.msra.mxu0 0.0
    %111 = vmatprep.subr.mxu0 0.0
    %112 = vmatpush1.msra.mxu0 0.0
    %113 = vmatprep.subr.mxu0 0.0
    %114 = vmatpush1.msra.mxu0 0.0
    %115 = vmatprep.subr.mxu0 0.0
    %116 = vmatpush1.msra.mxu0 0.0
    %117 = vmatprep.subr.mxu0 0.0
    %118 = vmatpush1.msra.mxu0 0.0
    %119 = vmatprep.mubr.f32.mxu0 0.0
    %120 = vmatmul.mubr.f32.gmra.mrb[0].mxu0 %v38
    %v121 = vpop.f32.mrb[0].mxu0
    %v122 = vadd.f32 0.0, %v121
    %v123 = vpop.f32.mrb[0].mxu0
    %124 = vdwg.mxu0
    %125 = vst [vmem:[#allocation7] sm:$0xff] %v122
    // Predicated region
    $region18: #{tpu_custom_call.1} parent=1 // pred_check
      _
    $region19: #{tpu_custom_call.1} parent=1 // pred_check_branch
      %127 = sbr.rel (0) target = $region21
    $region20: #{tpu_custom_call.1} parent=1 // pred_region
      %s129 = ssub.s32 128, 128
      %130 = vsyncadd [#allocation4], %s129
      %s132 = sshll.u32 [#allocation7], 4
      %s133 = int_to_ptr.vmem [resolvable:$true] %s132
      %135 = dma.vmem_to_hbm [thread:$0]  %s133, 128, %s2, [#allocation4]
    $region21: #{tpu_custom_call.1} parent=1 // pred_fallthru
      _
    // Predicated region
    $region22: #{tpu_custom_call.1} parent=1 // pred_check
      _
    $region23: #{tpu_custom_call.1} parent=1 // pred_check_branch
      %137 = sbr.rel (0) target = $region25
    $region24: #{tpu_custom_call.1} parent=1 // pred_region
      %138 = dma.done [#allocation4], 128
    $region25: #{tpu_custom_call.1} parent=1 // pred_fallthru
      _
    %139 = vsyncpa [#allocation3], 1
    %140 = vsyncpa [#allocation6], 1
    %141 = vsyncpa [#allocation4], 1

</llo_original>
